<compile_context>
chip_gen: v5e
topology: v5e:2x2
jax: 0.10.0
libtpu: 0.0.40
codegen_flags: <defaults>
</compile_context>

<pallas_src>
import functools
import math

import jax
import jax.numpy as jnp
from jax.experimental import pallas as pl
from jax.experimental.pallas import tpu as pltpu


@functools.lru_cache(maxsize=None)
def _vmem_limit_bytes():
    """Scoped-VMEM request: ~3/4 of physical, capped at 96 MiB; safe 48 MiB fallback."""
    limit = 48 * 1024 * 1024            # safe on v7x (64 MiB physical VMEM)
    try:
        cap = int(pltpu.get_tpu_info().vmem_capacity_bytes)
        limit = min(96 * 1024 * 1024, max(limit, (cap * 3) // 4))
    except Exception:
        pass
    return int(limit)


def _pick_tile(dim, candidates):
    """Largest candidate tile that evenly divides `dim`; fall back to the full dim."""
    for c in candidates:
        if c <= dim and dim % c == 0:
            return c
    return dim


# ----------------------------------------------------------------------------
# Fused linear kernel (full-K contraction):
#   y = act( LN( (x @ w + b) [+ residual] ) )
#   x:(tm,K) bf16, w:(K,tn) bf16, bias/gamma/beta f32, residual bf16; f32 math.
# ----------------------------------------------------------------------------
def _fused_linear_kernel(x_ref, w_ref, b_ref, *rest, act, has_res, has_ln, eps):
    idx = 0
    res_ref = g_ref = beta_ref = None
    if has_res:
        res_ref = rest[idx]
        idx += 1
    if has_ln:
        g_ref, beta_ref = rest[idx], rest[idx + 1]
        idx += 2
    o_ref = rest[idx]

    y = jnp.dot(x_ref[...], w_ref[...], preferred_element_type=jnp.float32)
    y = y + b_ref[...]
    if has_res:
        y = y + res_ref[...].astype(jnp.float32)          # residual add in f32
    if has_ln:
        mu = jnp.mean(y, axis=-1, keepdims=True)
        yc = y - mu
        var = jnp.mean(yc * yc, axis=-1, keepdims=True)
        y = yc * jax.lax.rsqrt(var + eps) * g_ref[...] + beta_ref[...]
    if act == "gelu":
        # tanh-approx GELU.  # TODO(synk): exact erf-GELU to match HF BERT bit-for-bit
        c = math.sqrt(2.0 / math.pi)
        y = 0.5 * y * (1.0 + jnp.tanh(c * (y + 0.044715 * y * y * y)))
    elif act == "tanh":
        y = jnp.tanh(y)
    elif act == "relu":
        y = jnp.maximum(y, 0.0)
    o_ref[...] = y.astype(o_ref.dtype)


def fused_linear(x, w, b, *, vmem_limit, act="none", residual=None, ln_params=None,
                 eps=1e-12, out_dtype=jnp.bfloat16):
    M, K = x.shape
    N = w.shape[1]
    has_res = residual is not None
    has_ln = ln_params is not None
    out_bytes = jnp.dtype(out_dtype).itemsize

    # TODO(synk): add a K-split (accumulating) fallback path for K too large for VMEM.
    budget = int(vmem_limit * 0.7)
    tm_cands = [t for t in (1024, 512, 256, 128) if t <= M and M % t == 0] or [M]
    if has_ln:
        tn_cands = [N]                      # LN epilogue needs the full feature axis
    else:
        tn_cands = [t for t in (512, 256) if t <= N and N % t == 0] or [N]

    def _need(tm_, tn_):                    # double-buffered working set estimate
        n = 2 * (tm_ * K * 2 + K * tn_ * 2 + tm_ * tn_ * out_bytes)
        if has_res:
            n += 2 * tm_ * tn_ * 2
        return n

    tm, tn = tm_cands[-1], tn_cands[-1]
    picked = False
    for cm in tm_cands:
        for cn in tn_cands:
            if _need(cm, cn) <= budget:
                tm, tn, picked = cm, cn, True
                break
        if picked:
            break
    grid = (M // tm, N // tn)

    in_specs = [
        pl.BlockSpec((tm, K), lambda i, j: (i, 0)),     # resident across the j sweep
        pl.BlockSpec((K, tn), lambda i, j: (0, j)),
        pl.BlockSpec((1, tn), lambda i, j: (0, j)),
    ]
    args = [x.astype(jnp.bfloat16),
            w.astype(jnp.bfloat16),
            b.reshape(1, N).astype(jnp.float32)]
    if has_res:
        in_specs.append(pl.BlockSpec((tm, tn), lambda i, j: (i, j)))
        args.append(residual.astype(jnp.bfloat16))
    if has_ln:
        gamma, beta = ln_params
        in_specs.append(pl.BlockSpec((1, tn), lambda i, j: (0, j)))
        in_specs.append(pl.BlockSpec((1, tn), lambda i, j: (0, j)))
        args.append(gamma.reshape(1, N).astype(jnp.float32))
        args.append(beta.reshape(1, N).astype(jnp.float32))

    transc = M * N if act in ("gelu", "tanh") else 0
    bytes_accessed = (M * K * 2 + K * N * 2 + M * N * out_bytes
                      + (M * N * 2 if has_res else 0))
    cost = pl.CostEstimate(flops=2 * M * K * N, transcendentals=transc,
                           bytes_accessed=bytes_accessed)

    return pl.pallas_call(
        functools.partial(_fused_linear_kernel, act=act,
                          has_res=has_res, has_ln=has_ln, eps=eps),
        out_shape=jax.ShapeDtypeStruct((M, N), out_dtype),
        grid=grid,
        in_specs=in_specs,
        out_specs=pl.BlockSpec((tm, tn), lambda i, j: (i, j)),
        cost_estimate=cost,
        compiler_params=pltpu.CompilerParams(
            dimension_semantics=("parallel", "parallel"),
            vmem_limit_bytes=vmem_limit),
    )(*args)


# ----------------------------------------------------------------------------
# Embedding sum + LayerNorm fused kernel: LN(word + pos + type)
# ----------------------------------------------------------------------------
def _embed_ln_kernel(w_ref, pt_ref, g_ref, b_ref, o_ref, *, eps):
    x = w_ref[...].astype(jnp.float32) + pt_ref[...]
    mu = jnp.mean(x, axis=-1, keepdims=True)
    xc = x - mu
    var = jnp.mean(xc * xc, axis=-1, keepdims=True)
    y = xc * jax.lax.rsqrt(var + eps) * g_ref[...] + b_ref[...]
    o_ref[...] = y.astype(o_ref.dtype)


def embed_layernorm(word, pos_type, gamma, beta, *, vmem_limit, eps=1e-12,
                    out_dtype=jnp.bfloat16):
    B, S, H = word.shape
    ts = _pick_tile(S, (512, 256, 128))
    return pl.pallas_call(
        functools.partial(_embed_ln_kernel, eps=eps),
        out_shape=jax.ShapeDtypeStruct((B, S, H), out_dtype),
        grid=(B, S // ts),
        in_specs=[pl.BlockSpec((pl.Squeezed(), ts, H), lambda b, s: (b, s, 0)),
                  pl.BlockSpec((ts, H), lambda b, s: (s, 0)),
                  pl.BlockSpec((1, H), lambda b, s: (0, 0)),
                  pl.BlockSpec((1, H), lambda b, s: (0, 0))],
        out_specs=pl.BlockSpec((pl.Squeezed(), ts, H), lambda b, s: (b, s, 0)),
        compiler_params=pltpu.CompilerParams(
            dimension_semantics=("parallel", "parallel"),
            vmem_limit_bytes=vmem_limit),
    )(word, pos_type.astype(jnp.float32),
      gamma.reshape(1, H).astype(jnp.float32),
      beta.reshape(1, H).astype(jnp.float32))


# ----------------------------------------------------------------------------
# Multi-head attention — consumes the packed (B,S,3,nh,Dh) QKV slab directly,
# writes a lane-dense (B,S,nh*Dh) context slab.
# ----------------------------------------------------------------------------
def _attn_kernel(q_ref, k_ref, v_ref, bias_ref, o_ref, *, scale, heads):
    q = q_ref[...]                                  # (S, hb, Dh) bf16
    k = k_ref[...]
    v = v_ref[...]
    bias = bias_ref[...]                            # (1, S) f32 additive mask
    ctx_heads = []
    for h in range(heads):                          # static unroll over the head block
        qh, kh, vh = q[:, h, :], k[:, h, :], v[:, h, :]
        s = jax.lax.dot_general(qh, kh, (((1,), (1,)), ((), ())),
                                preferred_element_type=jnp.float32)      # (S, S)
        s = s * scale + bias
        m = jnp.max(s, axis=-1, keepdims=True)
        p = jnp.exp(s - m)
        denom = jnp.sum(p, axis=-1, keepdims=True)
        p = p * pl.reciprocal(denom, approx=True)   # EUP instead of VALU divide
        ctx_heads.append(jnp.dot(p.astype(vh.dtype), vh,
                                 preferred_element_type=jnp.float32))    # (S, Dh)
    o_ref[...] = jnp.concatenate(ctx_heads, axis=-1).astype(o_ref.dtype)


def mha_attention(qkv, att_bias, *, vmem_limit, out_dtype=jnp.bfloat16):
    """qkv: (B, S, 3, nh, Dh) bf16; att_bias: (B, 1, S) f32 -> (B, S, nh*Dh)."""
    B, S, _, nh, Dh = qkv.shape
    H = nh * Dh
    scale = 1.0 / math.sqrt(Dh)

    # choose head block against the real per-step live set (s/p f32 + bf16 copy + qkv/out)
    budget = int(vmem_limit * 0.6)

    def _live(h):
        return int(2.5 * h * S * S * 4) + 3 * 2 * S * h * Dh * 2 + 2 * S * h * Dh * 2

    hb = nh
    for h in sorted([d for d in range(1, nh + 1) if nh % d == 0], reverse=True):
        layout_ok = (h == nh) or (h % 8 == 0 and (h * Dh) % 128 == 0)
        if layout_ok and _live(h) <= budget:
            hb = h
            break
    # TODO(synk): flash-style online-softmax with a KV grid axis for S >= 1024 (v7x VMEM)

    qkv_block = (pl.Squeezed(), S, pl.Squeezed(), hb, Dh)
    q_spec = pl.BlockSpec(qkv_block, lambda b, h: (b, 0, 0, h, 0))
    k_spec = pl.BlockSpec(qkv_block, lambda b, h: (b, 0, 1, h, 0))
    v_spec = pl.BlockSpec(qkv_block, lambda b, h: (b, 0, 2, h, 0))
    bias_spec = pl.BlockSpec((pl.Squeezed(), 1, S), lambda b, h: (b, 0, 0))
    out_spec = pl.BlockSpec((pl.Squeezed(), S, hb * Dh), lambda b, h: (b, 0, h))

    return pl.pallas_call(
        functools.partial(_attn_kernel, scale=scale, heads=hb),
        out_shape=jax.ShapeDtypeStruct((B, S, H), out_dtype),
        grid=(B, nh // hb),
        in_specs=[q_spec, k_spec, v_spec, bias_spec],
        out_specs=out_spec,
        compiler_params=pltpu.CompilerParams(
            dimension_semantics=("parallel", "parallel"),
            vmem_limit_bytes=vmem_limit),
    )(qkv, qkv, qkv, att_bias)


# ----------------------------------------------------------------------------
# Pooler + classifier head fused into one kernel (dropout is identity in eval):
#   logits = relu( tanh(cls @ Wp + bp) @ Wc + bc )
# ----------------------------------------------------------------------------
def _head_kernel(cls_ref, wp_ref, bp_ref, wc_ref, bc_ref, o_ref):
    pooled = jnp.tanh(jnp.dot(cls_ref[...], wp_ref[...],
                              preferred_element_type=jnp.float32) + bp_ref[...])
    logits = jnp.dot(pooled.astype(wc_ref.dtype), wc_ref[...],
                     preferred_element_type=jnp.float32) + bc_ref[...]
    o_ref[...] = jnp.maximum(logits, 0.0)


def pooler_classifier_head(cls_tok, wp, bp, wc_pad, bc_pad, *, vmem_limit):
    B, H = cls_tok.shape
    Lp = wc_pad.shape[1]
    return pl.pallas_call(
        _head_kernel,
        out_shape=jax.ShapeDtypeStruct((B, Lp), jnp.float32),
        grid=(1,),
        in_specs=[pl.BlockSpec((B, H), lambda i: (0, 0)),
                  pl.BlockSpec((H, H), lambda i: (0, 0)),
                  pl.BlockSpec((1, H), lambda i: (0, 0)),
                  pl.BlockSpec((H, Lp), lambda i: (0, 0)),
                  pl.BlockSpec((1, Lp), lambda i: (0, 0))],
        out_specs=pl.BlockSpec((B, Lp), lambda i: (0, 0)),
        compiler_params=pltpu.CompilerParams(
            dimension_semantics=("arbitrary",),
            vmem_limit_bytes=vmem_limit),
    )(cls_tok.astype(jnp.bfloat16), wp.astype(jnp.bfloat16),
      bp.reshape(1, H).astype(jnp.float32),
      wc_pad.astype(jnp.bfloat16), bc_pad.reshape(1, Lp).astype(jnp.float32))


# ----------------------------------------------------------------------------
# Deterministic parameter construction (synthetic "pretrained" BERT)
# ----------------------------------------------------------------------------
def init_params(key, *, vocab, max_pos, hidden, n_heads, n_layers, intermediate, labels):
    def nrm(k, shape, dtype=jnp.float32):
        return (0.02 * jax.random.normal(k, shape, dtype=jnp.float32)).astype(dtype)

    keys = jax.random.split(key, 5 + n_layers)
    labels_pad = ((labels + 127) // 128) * 128   # lane-dense classifier output
    params = {
        "n_heads": n_heads,
        "n_labels": labels,
        "word_emb": nrm(keys[0], (vocab, hidden)),
        "pos_emb": nrm(keys[1], (max_pos, hidden)),
        "type_emb": nrm(keys[2], (2, hidden)),
        "emb_ln_g": jnp.ones((hidden,), jnp.float32),
        "emb_ln_b": jnp.zeros((hidden,), jnp.float32),
        "layers": [],
    }
    for li in range(n_layers):
        lk = jax.random.split(keys[3 + li], 4)
        params["layers"].append({
            # fused QKV weight (H, 3H) in bf16 (columns = [Q | K | V], heads contiguous)
            "wqkv": nrm(lk[0], (hidden, 3 * hidden), jnp.bfloat16),
            "bqkv": jnp.zeros((3 * hidden,), jnp.float32),
            "wo": nrm(lk[1], (hidden, hidden), jnp.bfloat16),
            "bo": jnp.zeros((hidden,), jnp.float32),
            "ln1_g": jnp.ones((hidden,), jnp.float32),
            "ln1_b": jnp.zeros((hidden,), jnp.float32),
            "wi": nrm(lk[2], (hidden, intermediate), jnp.bfloat16),
            "bi": jnp.zeros((intermediate,), jnp.float32),
            "wo2": nrm(lk[3], (intermediate, hidden), jnp.bfloat16),
            "bo2": jnp.zeros((hidden,), jnp.float32),
            "ln2_g": jnp.ones((hidden,), jnp.float32),
            "ln2_b": jnp.zeros((hidden,), jnp.float32),
        })
    pk = jax.random.split(keys[3 + n_layers], 2)
    params["wp"] = nrm(pk[0], (hidden, hidden), jnp.bfloat16)        # pooler
    params["bp"] = jnp.zeros((hidden,), jnp.float32)
    wc = nrm(pk[1], (hidden, labels), jnp.float32)                   # classifier head
    params["wc_pad"] = jnp.pad(wc, ((0, 0), (0, labels_pad - labels))).astype(jnp.bfloat16)
    params["bc_pad"] = jnp.zeros((labels_pad,), jnp.float32)
    return params


# ----------------------------------------------------------------------------
# Forward pass == BertClassifier.forward(input_id, mask)
# ----------------------------------------------------------------------------
def bert_classifier_forward(params, input_ids, mask):
    B, S = input_ids.shape
    H = params["word_emb"].shape[1]
    nh = params["n_heads"]
    Dh = H // nh
    vmem_limit = _vmem_limit_bytes()

    # --- BERT embeddings: gather is glue; sum + LayerNorm fused in one kernel ---
    word = jnp.take(params["word_emb"], input_ids, axis=0)            # (B, S, H) f32
    pos_type = params["pos_emb"][:S] + params["type_emb"][0][None, :]  # token_type_ids = 0
    x = embed_layernorm(word, pos_type, params["emb_ln_g"], params["emb_ln_b"],
                        vmem_limit=vmem_limit)                         # (B, S, H) bf16
    x = x.reshape(B * S, H)

    # extended attention mask: (1 - mask) * -10000, shape (B, 1, S)
    att_bias = (1.0 - mask.astype(jnp.float32))[:, None, :] * -10000.0

    # --- BERT encoder layers (activations stay bf16 between kernels) ---
    for layer in params["layers"]:
        qkv = fused_linear(x, layer["wqkv"], layer["bqkv"],
                           vmem_limit=vmem_limit, out_dtype=jnp.bfloat16)  # (B*S, 3H)
        qkv = qkv.reshape(B, S, 3, nh, Dh)          # pure reshape, no HBM relayout
        ctx = mha_attention(qkv, att_bias, vmem_limit=vmem_limit)          # (B, S, H)

        # attention output projection + residual + LayerNorm (fused epilogue)
        x = fused_linear(ctx.reshape(B * S, H), layer["wo"], layer["bo"],
                         residual=x, ln_params=(layer["ln1_g"], layer["ln1_b"]),
                         vmem_limit=vmem_limit, out_dtype=jnp.bfloat16)
        # FFN up-projection + GELU
        inter = fused_linear(x, layer["wi"], layer["bi"], act="gelu",
                             vmem_limit=vmem_limit, out_dtype=jnp.bfloat16)
        # FFN down-projection + residual + LayerNorm (fused epilogue)
        x = fused_linear(inter, layer["wo2"], layer["bo2"],
                         residual=x, ln_params=(layer["ln2_g"], layer["ln2_b"]),
                         vmem_limit=vmem_limit, out_dtype=jnp.bfloat16)

    # --- pooler(tanh Linear on [CLS]) -> dropout(identity, eval) -> Linear -> ReLU ---
    cls_tok = x.reshape(B, S, H)[:, 0, :]                              # (B, H) bf16
    logits_pad = pooler_classifier_head(cls_tok, params["wp"], params["bp"],
                                        params["wc_pad"], params["bc_pad"],
                                        vmem_limit=vmem_limit)
    return logits_pad[:, :params["n_labels"]]                          # (B, labels)


if __name__ == "__main__":
    B, S = 2, 8
    VOCAB, MAX_POS = 100, 16
    HIDDEN, N_HEADS, N_LAYERS, INTERMEDIATE, LABELS = 32, 2, 2, 64, 3

    root = jax.random.PRNGKey(0)
    k_param, k_ids, k_mask = jax.random.split(root, 3)
    params = init_params(k_param, vocab=VOCAB, max_pos=MAX_POS, hidden=HIDDEN,
                         n_heads=N_HEADS, n_layers=N_LAYERS,
                         intermediate=INTERMEDIATE, labels=LABELS)

    input_ids = jax.random.randint(k_ids, (B, S), 0, VOCAB, dtype=jnp.int32)
    # attention mask: last two tokens of second example are padding
    mask = jnp.ones((B, S), dtype=jnp.int32).at[1, -2:].set(0)

    logits = bert_classifier_forward(params, input_ids, mask)
    jax.block_until_ready(logits)
    assert logits.shape == (B, LABELS)
    print("KERNEL_OK")
</pallas_src>

<mosaic_0001>
module attributes {stable_mosaic.version = 11 : i64} {
  func.func @_embed_ln_kernel(%arg0: i32, %arg1: i32, %arg2: memref<1x8x32xf32, #tpu.memory_space<vmem>>, %arg3: memref<8x32xf32, #tpu.memory_space<vmem>>, %arg4: memref<1x32xf32, #tpu.memory_space<vmem>>, %arg5: memref<1x32xf32, #tpu.memory_space<vmem>>, %arg6: memref<1x8x32xbf16, #tpu.memory_space<vmem>>) attributes {dimension_semantics = [#tpu.dimension_semantics<parallel>, #tpu.dimension_semantics<parallel>], iteration_bounds = array<i64: 2, 1>, scalar_prefetch = 0 : i64, scratch_operands = 0 : i64, tpu.core_type = #tpu.core_type<tc>, window_params = [{transform_indices = @transform_0, window_bounds = array<i64: 1, 8, 32>}, {transform_indices = @transform_1, window_bounds = array<i64: 8, 32>}, {pipeline_mode = #tpu.pipeline_mode<synchronous>, transform_indices = @transform_2, window_bounds = array<i64: 1, 32>}, {pipeline_mode = #tpu.pipeline_mode<synchronous>, transform_indices = @transform_3, window_bounds = array<i64: 1, 32>}, {transform_indices = @transform_4, window_bounds = array<i64: 1, 8, 32>}]} {
    %c0 = arith.constant 0 : index
    %c0_0 = arith.constant 0 : index
    %c0_1 = arith.constant 0 : index
    %0 = vector.load %arg2[%c0, %c0_0, %c0_1] : memref<1x8x32xf32, #tpu.memory_space<vmem>>, vector<1x8x32xf32>
    %1 = vector.shape_cast %0 : vector<1x8x32xf32> to vector<8x32xf32>
    %c0_2 = arith.constant 0 : index
    %c0_3 = arith.constant 0 : index
    %2 = vector.load %arg3[%c0_2, %c0_3] : memref<8x32xf32, #tpu.memory_space<vmem>>, vector<8x32xf32>
    %3 = arith.addf %1, %2 : vector<8x32xf32>
    %cst = arith.constant dense<0.000000e+00> : vector<8xf32>
    %4 = vector.multi_reduction <add>, %3, %cst [1] : vector<8x32xf32> to vector<8xf32>
    %5 = vector.shape_cast %4 : vector<8xf32> to vector<8x1xf32>
    %cst_4 = arith.constant 3.200000e+01 : f32
    %6 = vector.broadcast %cst_4 : f32 to vector<8x1xf32>
    %7 = arith.divf %5, %6 : vector<8x1xf32>
    %8 = vector.broadcast %7 : vector<8x1xf32> to vector<8x32xf32>
    %9 = arith.subf %3, %8 : vector<8x32xf32>
    %10 = arith.mulf %9, %9 : vector<8x32xf32>
    %cst_5 = arith.constant dense<0.000000e+00> : vector<8xf32>
    %11 = vector.multi_reduction <add>, %10, %cst_5 [1] : vector<8x32xf32> to vector<8xf32>
    %12 = vector.shape_cast %11 : vector<8xf32> to vector<8x1xf32>
    %cst_6 = arith.constant 3.200000e+01 : f32
    %13 = vector.broadcast %cst_6 : f32 to vector<8x1xf32>
    %14 = arith.divf %12, %13 : vector<8x1xf32>
    %cst_7 = arith.constant 9.99999996E-13 : f32
    %15 = vector.broadcast %cst_7 : f32 to vector<8x1xf32>
    %16 = arith.addf %14, %15 : vector<8x1xf32>
    %17 = math.rsqrt %16 : vector<8x1xf32>
    %18 = vector.broadcast %17 : vector<8x1xf32> to vector<8x32xf32>
    %19 = arith.mulf %9, %18 : vector<8x32xf32>
    %c0_8 = arith.constant 0 : index
    %c0_9 = arith.constant 0 : index
    %20 = vector.load %arg4[%c0_8, %c0_9] : memref<1x32xf32, #tpu.memory_space<vmem>>, vector<1x32xf32>
    %21 = vector.broadcast %20 : vector<1x32xf32> to vector<8x32xf32>
    %22 = arith.mulf %19, %21 : vector<8x32xf32>
    %c0_10 = arith.constant 0 : index
    %c0_11 = arith.constant 0 : index
    %23 = vector.load %arg5[%c0_10, %c0_11] : memref<1x32xf32, #tpu.memory_space<vmem>>, vector<1x32xf32>
    %24 = vector.broadcast %23 : vector<1x32xf32> to vector<8x32xf32>
    %25 = arith.addf %22, %24 : vector<8x32xf32>
    %26 = arith.truncf %25 : vector<8x32xf32> to vector<8x32xbf16>
    %c0_12 = arith.constant 0 : index
    %c0_13 = arith.constant 0 : index
    %c0_14 = arith.constant 0 : index
    %27 = vector.load %arg6[%c0_12, %c0_13, %c0_14] : memref<1x8x32xbf16, #tpu.memory_space<vmem>>, vector<1x8x32xbf16>
    %28 = vector.shape_cast %27 : vector<1x8x32xbf16> to vector<8x32xbf16>
    %29 = vector.shape_cast %26 : vector<8x32xbf16> to vector<1x8x32xbf16>
    tpu.vector_store %arg6[%c0_12, %c0_13, %c0_14], %29 {strides = array<i32>} : memref<1x8x32xbf16, #tpu.memory_space<vmem>>, vector<1x8x32xbf16>,
    return
  }
  func.func @transform_0(%arg0: i32, %arg1: i32) -> (i32, i32, i32) {
    %c0_i32 = arith.constant 0 : i32
    %c0_i32_0 = arith.constant 0 : i32
    return %arg0, %arg1, %c0_i32 : i32, i32, i32
  }
  func.func @transform_1(%arg0: i32, %arg1: i32) -> (i32, i32) {
    %c0_i32 = arith.constant 0 : i32
    %c0_i32_0 = arith.constant 0 : i32
    return %arg1, %c0_i32 : i32, i32
  }
  func.func @transform_2(%arg0: i32, %arg1: i32) -> (i32, i32) {
    %c0_i32 = arith.constant 0 : i32
    %c0_i32_0 = arith.constant 0 : i32
    %c0_i32_1 = arith.constant 0 : i32
    return %c0_i32, %c0_i32_0 : i32, i32
  }
  func.func @transform_3(%arg0: i32, %arg1: i32) -> (i32, i32) {
    %c0_i32 = arith.constant 0 : i32
    %c0_i32_0 = arith.constant 0 : i32
    %c0_i32_1 = arith.constant 0 : i32
    return %c0_i32, %c0_i32_0 : i32, i32
  }
  func.func @transform_4(%arg0: i32, %arg1: i32) -> (i32, i32, i32) {
    %c0_i32 = arith.constant 0 : i32
    %c0_i32_0 = arith.constant 0 : i32
    return %arg0, %arg1, %c0_i32 : i32, i32, i32
  }
}

</mosaic_0001>

<llo_original>
// kernel: tpu_custom_call.1
$region0: #{tpu_custom_call.1}
  #allocation0 [shape = 'u32[]', space=smem, size = 0x4, offset = 0x4, fixed_abs, tag = 'smem constant byte address 0x4 - core index']
  #allocation1 [shape = 'u32[72,128]{1,0:T(1,128)}', space=vmem, size = 0x9000, scoped, tag = 'internal scratch']
  %s0 = inlined_call_operand.hbm [shape: f32[2,8,32], index: 0, kind: input, shape index: {}]
  %s1 = inlined_call_operand.hbm [shape: f32[8,32], index: 1, kind: input, shape index: {}]
  %s2 = inlined_call_operand.vmem [shape: f32[1,32], index: 2, kind: input, shape index: {}]
  %s3 = inlined_call_operand.vmem [shape: f32[1,32], index: 3, kind: input, shape index: {}]
  %s4 = inlined_call_operand.hbm [shape: bf16[2,8,32], index: 4, kind: output, shape index: {}]
  %s5 = sld [smem:[#allocation0]]
  $region57: #{tpu_custom_call.1} parent=0
    _
  %s7 = ssub.s32 1, %s5
  %s8 = scalar_select 0, %s7, %s5
  $region1: #{tpu_custom_call.1} parent=0
    #allocation2 [shape = 'u8[8192]{0}', space=vmem, size = 0x2000, scoped, tag = 'input window, operand 0']
    #allocation3 [shape = 's32[2]{0}', space=sflag, size = 0x8, scoped, tag = 'scoped memory for tpu_custom_call.1']
    #allocation4 [shape = 's32[2]{0}', space=sflag, size = 0x8, scoped, tag = 'scoped memory for tpu_custom_call.1']
    #allocation5 [shape = 'u8[4096]{0}', space=vmem, size = 0x1000, scoped, tag = 'input window, operand 1, single buffered']
    #allocation6 [shape = 's32[1]{0}', space=sflag, size = 0x4, scoped, tag = 'scoped memory for tpu_custom_call.1']
    #allocation7 [shape = 'u8[4096]{0}', space=vmem, size = 0x1000, scoped, tag = 'output window, operand 0']
    %9 = vsyncpa [#allocation3], 0
    %s10 = scalar_lea.sflag [#allocation3], 1
    %11 = vsyncpa %s10, 0
    %12 = vsyncpa [#allocation6], 0
    %13 = vsyncpa [#allocation4], 0
    %s14 = scalar_lea.sflag [#allocation4], 1
    %15 = vsyncpa %s14, 0
    loop: start=0, step=1, limit=4
    $region2: #{tpu_custom_call.1} parent=1 // loop_pre_header
      _
    $region3: #{tpu_custom_call.1} parent=1 // loop_header
      %s17 = sphi 0, %s21
      %p18 = scmp.ge.s32.totalorder %s17, 4
      %s24 = sphi 0, %s36
      %s25 = sphi 0, %s32
      %s26 = sphi 0, %s24
      %s27 = sphi 0, %s25
      %s28 = sphi 0, %s26
      %s29 = sphi 0, %s27
      %s41 = sphi 0, %s43
      %s44 = sphi 0, %s41
      %s45 = sphi 0, %s44
      %s61 = sphi 0, %s45
      %s67 = sphi 0, %s69
      %s70 = sphi 0, %s67
      %s71 = sphi 0, %s70
      %s87 = sphi 0, %s71
      %s91 = sphi 0, %s91
      %s93 = sphi 0, %s91
      %s94 = sphi 0, %s93
      %s108 = sphi 0, %s94
      %s112 = sphi 0, %s112
      %s114 = sphi 0, %s112
      %s115 = sphi 0, %s114
      %s129 = sphi 0, %s115
      %s137 = sphi 0, %s139
      %s140 = sphi 0, %s137
      %s141 = sphi 0, %s140
      %s157 = sphi 0, %s141
    $region4: #{tpu_custom_call.1} parent=1 // loop_header_branch
      %20 = sbr.rel (%p18) target = $region8
    $region5: #{tpu_custom_call.1} parent=1 // loop_body
      %s22 = ssub.s32 %s17, 1
      %s23 = ssub.s32 %s17, 2
      %s30 = sadd.s32 1, %s25
      %p31 = scmp.ge.s32.totalorder %s30, 1
      %s32 = scalar_select %p31, 0, %s30
      %s33 = sadd.s32 1, %s24
      %s34 = scalar_select %p31, %s33, %s24
      %p35 = scmp.ge.s32.totalorder %s34, 2
      %s36 = scalar_select %p35, 0, %s34
      %s37 = ssub.s32 %s24, %s36
      %s38 = ssub.s32 %s25, %s32
      %s39 = sor.u32 %s37, %s38
      %p40 = scmp.eq.s32.totalorder %s39, 0
      %s42 = sadd.s32 %s41, 1
      %s43 = scalar_select %p40, %s41, %s42
      %p46 = pneg %p40
      %p47 = scmp.eq.s32.totalorder %s17, 1
      %p48 = por %p46, %p47
      %p49 = scmp.ne.s32.totalorder %s41, %s44
      %p50 = scmp.eq.s32.totalorder %s17, 0
      %p51 = por %p49, %p50
      %p52 = scmp.ne.s32.totalorder %s41, %s44
      %p53 = scmp.eq.s32.totalorder %s22, 1
      %p54 = por %p52, %p53
      %p55 = scmp.ne.s32.totalorder %s44, %s45
      %p56 = scmp.eq.s32.totalorder %s22, 0
      %p57 = por %p55, %p56
      %p58 = scmp.ne.s32.totalorder %s44, %s45
      %p59 = scmp.eq.s32.totalorder %s23, 1
      %p60 = por %p58, %p59
      %p62 = scmp.ne.s32.totalorder %s45, %s61
      %p63 = scmp.eq.s32.totalorder %s23, 0
      %p64 = por %p62, %p63
      %s65 = ssub.s32 %s25, %s32
      %p66 = scmp.eq.s32.totalorder %s65, 0
      %s68 = sadd.s32 %s67, 1
      %s69 = scalar_select %p66, %s67, %s68
      %p72 = pneg %p66
      %p73 = scmp.eq.s32.totalorder %s17, 1
      %p74 = por %p72, %p73
      %p75 = scmp.ne.s32.totalorder %s67, %s70
      %p76 = scmp.eq.s32.totalorder %s17, 0
      %p77 = por %p75, %p76
      %p78 = scmp.ne.s32.totalorder %s67, %s70
      %p79 = scmp.eq.s32.totalorder %s22, 1
      %p80 = por %p78, %p79
      %p81 = scmp.ne.s32.totalorder %s70, %s71
      %p82 = scmp.eq.s32.totalorder %s22, 0
      %p83 = por %p81, %p82
      %p84 = scmp.ne.s32.totalorder %s70, %s71
      %p85 = scmp.eq.s32.totalorder %s23, 1
      %p86 = por %p84, %p85
      %p88 = scmp.ne.s32.totalorder %s71, %s87
      %p89 = scmp.eq.s32.totalorder %s23, 0
      %p90 = por %p88, %p89
      %s92 = sadd.s32 %s91, 1
      %p95 = scmp.eq.s32.totalorder %s17, 1
      %p96 = scmp.ne.s32.totalorder %s91, %s93
      %p97 = scmp.eq.s32.totalorder %s17, 0
      %p98 = por %p96, %p97
      %p99 = scmp.ne.s32.totalorder %s91, %s93
      %p100 = scmp.eq.s32.totalorder %s22, 1
      %p101 = por %p99, %p100
      %p102 = scmp.ne.s32.totalorder %s93, %s94
      %p103 = scmp.eq.s32.totalorder %s22, 0
      %p104 = por %p102, %p103
      %p105 = scmp.ne.s32.totalorder %s93, %s94
      %p106 = scmp.eq.s32.totalorder %s23, 1
      %p107 = por %p105, %p106
      %p109 = scmp.ne.s32.totalorder %s94, %s108
      %p110 = scmp.eq.s32.totalorder %s23, 0
      %p111 = por %p109, %p110
      %s113 = sadd.s32 %s112, 1
      %p116 = scmp.eq.s32.totalorder %s17, 1
      %p117 = scmp.ne.s32.totalorder %s112, %s114
      %p118 = scmp.eq.s32.totalorder %s17, 0
      %p119 = por %p117, %p118
      %p120 = scmp.ne.s32.totalorder %s112, %s114
      %p121 = scmp.eq.s32.totalorder %s22, 1
      %p122 = por %p120, %p121
      %p123 = scmp.ne.s32.totalorder %s114, %s115
      %p124 = scmp.eq.s32.totalorder %s22, 0
      %p125 = por %p123, %p124
      %p126 = scmp.ne.s32.totalorder %s114, %s115
      %p127 = scmp.eq.s32.totalorder %s23, 1
      %p128 = por %p126, %p127
      %p130 = scmp.ne.s32.totalorder %s115, %s129
      %p131 = scmp.eq.s32.totalorder %s23, 0
      %p132 = por %p130, %p131
      %s133 = ssub.s32 %s24, %s36
      %s134 = ssub.s32 %s25, %s32
      %s135 = sor.u32 %s133, %s134
      %p136 = scmp.eq.s32.totalorder %s135, 0
      %s138 = sadd.s32 %s137, 1
      %s139 = scalar_select %p136, %s137, %s138
      %p142 = pneg %p136
      %p143 = scmp.eq.s32.totalorder %s17, 1
      %p144 = por %p142, %p143
      %p145 = scmp.ne.s32.totalorder %s137, %s140
      %p146 = scmp.eq.s32.totalorder %s17, 0
      %p147 = por %p145, %p146
      %p148 = scmp.ne.s32.totalorder %s137, %s140
      %p149 = scmp.eq.s32.totalorder %s22, 1
      %p150 = por %p148, %p149
      %p151 = scmp.ne.s32.totalorder %s140, %s141
      %p152 = scmp.eq.s32.totalorder %s22, 0
      %p153 = por %p151, %p152
      %p154 = scmp.ne.s32.totalorder %s140, %s141
      %p155 = scmp.eq.s32.totalorder %s23, 1
      %p156 = por %p154, %p155
      %p158 = scmp.ne.s32.totalorder %s141, %s157
      %p159 = scmp.eq.s32.totalorder %s23, 0
      %p160 = por %p158, %p159
      %p161 = scmp.le.s32.totalorder 1, %s17
      %p162 = scmp.lt.s32.totalorder %s17, 3
      %p163 = pnand %p161, %p162
      %p164 = pneg %p163
      // Predicated region
      $region9: #{tpu_custom_call.1} parent=5 // pred_check
        _
      $region10: #{tpu_custom_call.1} parent=5 // pred_check_branch
        %166 = sbr.rel (%p163) target = $region12
      $region11: #{tpu_custom_call.1} parent=5 // pred_region
        %s167 = ssub.s32 %s17, 1
        // Predicated region
        $region13: #{tpu_custom_call.1} parent=11 // pred_check
          %p168 = pneg %p83
        $region14: #{tpu_custom_call.1} parent=11 // pred_check_branch
          %170 = sbr.rel (%p168) target = $region16
        $region15: #{tpu_custom_call.1} parent=11 // pred_region
          %172 = vsyncadd [#allocation6], 0
          %s173 = smul.addr %s27, 8
          %s174 = scalar_lea.hbm %s1, %s173
          %s176 = sshll.u32 %s174, 4
          %s177 = int_to_ptr.hbm [resolvable:$true] %s176
          %s178 = sshll.u32 [#allocation5], 4
          %s179 = int_to_ptr.vmem [resolvable:$true] %s178
          %181 = dma.hbm_to_vmem [thread:$0]  %s177, 128, %s179, [#allocation6]
        $region16: #{tpu_custom_call.1} parent=11 // pred_fallthru
          _
        // Predicated region
        $region17: #{tpu_custom_call.1} parent=11 // pred_check
          %p182 = pneg %p104
        $region18: #{tpu_custom_call.1} parent=11 // pred_check_branch
          %184 = sbr.rel (%p182) target = $region20
        $region19: #{tpu_custom_call.1} parent=11 // pred_region
          _
        $region20: #{tpu_custom_call.1} parent=11 // pred_fallthru
          _
        // Predicated region
        $region21: #{tpu_custom_call.1} parent=11 // pred_check
          %p185 = pneg %p125
        $region22: #{tpu_custom_call.1} parent=11 // pred_check_branch
          %187 = sbr.rel (%p185) target = $region24
        $region23: #{tpu_custom_call.1} parent=11 // pred_region
          _
        $region24: #{tpu_custom_call.1} parent=11 // pred_fallthru
          _
      $region12: #{tpu_custom_call.1} parent=5 // pred_fallthru
        _
      %p188 = scmp.lt.s32.totalorder %s17, 2
      // Predicated region
      $region25: #{tpu_custom_call.1} parent=5 // pred_check
        %p189 = pneg %p188
      $region26: #{tpu_custom_call.1} parent=5 // pred_check_branch
        %191 = sbr.rel (%p189) target = $region28
      $region27: #{tpu_custom_call.1} parent=5 // pred_region
        // Predicated region
        $region29: #{tpu_custom_call.1} parent=27 // pred_check
          %p192 = pneg %p51
        $region30: #{tpu_custom_call.1} parent=27 // pred_check_branch
          %194 = sbr.rel (%p192) target = $region32
        $region31: #{tpu_custom_call.1} parent=27 // pred_region
          %s195 = sand.u32 %s41, 1
          %s196 = scalar_lea.sflag [#allocation3], %s195
          %s197 = sand.u32 %s41, 1
          %s198 = smul.addr %s197, 8
          %s199 = scalar_lea.vmem [#allocation2], %s198
          %201 = vsyncadd %s196, 0
          %s202 = sadd.s32 %s25, %s24
          %s203 = smul.addr %s202, 8
          %s204 = scalar_lea.hbm %s0, %s203
          %s206 = sshll.u32 %s204, 4
          %s207 = int_to_ptr.hbm [resolvable:$true] %s206
          %s208 = sshll.u32 %s199, 4
          %s209 = int_to_ptr.vmem [resolvable:$true] %s208
          %211 = dma.hbm_to_vmem [thread:$0]  %s207, 128, %s209, %s196
        $region32: #{tpu_custom_call.1} parent=27 // pred_fallthru
          _
      $region28: #{tpu_custom_call.1} parent=5 // pred_fallthru
        _
      %p212 = scmp.le.s32.totalorder 1, %s17
      %p213 = scmp.lt.s32.totalorder %s17, 3
      %p214 = pnand %p212, %p213
      %p215 = pneg %p214
      // Predicated region
      $region33: #{tpu_custom_call.1} parent=5 // pred_check
        _
      $region34: #{tpu_custom_call.1} parent=5 // pred_check_branch
        %217 = sbr.rel (%p214) target = $region36
      $region35: #{tpu_custom_call.1} parent=5 // pred_region
        %s218 = ssub.s32 %s17, 1
        %s219 = sand.u32 %s44, 1
        %s220 = scalar_lea.sflag [#allocation3], %s219
        %s221 = sand.u32 %s44, 1
        %s222 = smul.addr %s221, 8
        %s223 = scalar_lea.vmem [#allocation2], %s222
        // Predicated region
        $region37: #{tpu_custom_call.1} parent=35 // pred_check
          %p224 = pneg %p57
        $region38: #{tpu_custom_call.1} parent=35 // pred_check_branch
          %226 = sbr.rel (%p224) target = $region40
        $region39: #{tpu_custom_call.1} parent=35 // pred_region
          %228 = dma.done %s220, 128
        $region40: #{tpu_custom_call.1} parent=35 // pred_fallthru
          _
        // Predicated region
        $region41: #{tpu_custom_call.1} parent=35 // pred_check
          %p229 = pneg %p83
        $region42: #{tpu_custom_call.1} parent=35 // pred_check_branch
          %231 = sbr.rel (%p229) target = $region44
        $region43: #{tpu_custom_call.1} parent=35 // pred_region
          %233 = dma.done [#allocation6], 128
        $region44: #{tpu_custom_call.1} parent=35 // pred_fallthru
          _
        %s234 = sand.u32 %s44, 1
        %s235 = scalar_lea.sflag [#allocation3], %s234
        %s236 = sand.u32 %s44, 1
        %s237 = smul.addr %s236, 8
        %s238 = scalar_lea.vmem [#allocation2], %s237
        %p239 = pneg %p57
        %p240 = pneg %p54
        %p241 = pneg %p83
        %p242 = pneg %p80
        %p243 = pneg %p104
        %p244 = pneg %p101
        %p245 = pneg %p125
        %p246 = pneg %p122
        %p247 = pneg %p153
        %p248 = pneg %p150
        %s249 = sand.u32 %s140, 1
        %s250 = scalar_lea.sflag [#allocation4], %s249
        %s251 = sand.u32 %s140, 1
        %s252 = smul.addr %s251, 4
        %s253 = scalar_lea.vmem [#allocation7], %s252
        %v254 = vld [vmem:[%s223] sm:$0xff]
        %v255 = vld [vmem:[#allocation5] sm:$0xff]
        %v256 = vadd.f32 %v254, %v255
        %vm257 = vcmask 261120
        %v258 = vsel %vm257, %v256, 0.0
        %259 = vadd.xlane.f32.xlu0 %v258
        %v260 = vpop.xlane.xlu0 %259
        %v261 = vrcp.pop 32.0
        %v262 = vmul.f32 32.0, %v261
        %v263 = vsub.f32 1.0, %v262
        %v264 = vmul.f32 %v261, %v263
        %v265 = vadd.f32 %v261, %v264
        %vm266 = vweird.f32 %v261
        %v267 = vsel %vm266, %v261, %v265
        %v268 = vmul.f32 %v260, %v267
        %v269 = vsub.f32 %v256, %v268
        %v270 = vmul.f32 %v269, %v269
        %v271 = vsel %vm257, %v270, 0.0
        %272 = vadd.xlane.f32.xlu0 %v271
        %v273 = vpop.xlane.xlu0 %272
        %v274 = vmul.f32 %v273, %v267
        %v275 = vadd.f32 %v274, 1e-12
        %v276 = vrsqrt.pop %v275
        %v277 = vmul.f32 %v276, %v275
        %v278 = vmul.f32 %v277, %v276
        %v279 = vmul.f32 0.5, %v278
        %v280 = vsub.f32 1.5, %v279
        %v281 = vmul.f32 %v276, %v280
        %vm282 = vweird.f32 %v275
        %vm283 = vweird.f32 %v276
        %vm284 = vmor %vm282, %vm283
        %v285 = vsel %vm284, %v276, %v281
        %v286 = vmul.f32 %v269, %v285
        %v287 = vld [vmem:[%s2] sm:$0x1]
        %v289 = vperm.slane %v287, 0
        %v291 = vmul.f32 %v286, %v289
        %v292 = vld [vmem:[%s3] sm:$0x1]
        %v294 = vperm.slane %v292, 0
        %v296 = vadd.f32 %v291, %v294
        %v297 = vpack.c.bf16 %v296, %v296
        %vm298 = vcmask 257024
        %299 = vst.msk [vmem:[%s253] sm:$0xf] %vm298, %v297
        %s300 = sand.u32 %s140, 1
        %s301 = scalar_lea.sflag [#allocation4], %s300
        %s302 = sand.u32 %s140, 1
        %s303 = smul.addr %s302, 4
        %s304 = scalar_lea.vmem [#allocation7], %s303
        // Predicated region
        $region45: #{tpu_custom_call.1} parent=35 // pred_check
          %p305 = pneg %p150
        $region46: #{tpu_custom_call.1} parent=35 // pred_check_branch
          %307 = sbr.rel (%p305) target = $region48
        $region47: #{tpu_custom_call.1} parent=35 // pred_region
          %309 = vsyncadd %s301, 0
          %s310 = sadd.s32 %s27, %s26
          %s311 = smul.addr %s310, 4
          %s312 = scalar_lea.hbm %s4, %s311
          %s314 = sshll.u32 %s304, 4
          %s315 = int_to_ptr.vmem [resolvable:$true] %s314
          %s316 = sshll.u32 %s312, 4
          %s317 = int_to_ptr.hbm [resolvable:$true] %s316
          %319 = dma.vmem_to_hbm [thread:$0]  %s315, 64, %s317, %s301
        $region48: #{tpu_custom_call.1} parent=35 // pred_fallthru
          _
      $region36: #{tpu_custom_call.1} parent=5 // pred_fallthru
        _
      %p320 = scmp.le.s32.totalorder 2, %s17
      // Predicated region
      $region49: #{tpu_custom_call.1} parent=5 // pred_check
        %p321 = pneg %p320
      $region50: #{tpu_custom_call.1} parent=5 // pred_check_branch
        %323 = sbr.rel (%p321) target = $region52
      $region51: #{tpu_custom_call.1} parent=5 // pred_region
        %s324 = ssub.s32 %s17, 2
        // Predicated region
        $region53: #{tpu_custom_call.1} parent=51 // pred_check
          %p325 = pneg %p156
        $region54: #{tpu_custom_call.1} parent=51 // pred_check_branch
          %327 = sbr.rel (%p325) target = $region56
        $region55: #{tpu_custom_call.1} parent=51 // pred_region
          %s328 = sand.u32 %s141, 1
          %s329 = scalar_lea.sflag [#allocation4], %s328
          %s330 = sand.u32 %s141, 1
          %s331 = smul.addr %s330, 4
          %s332 = scalar_lea.vmem [#allocation7], %s331
          %334 = dma.done %s329, 64
        $region56: #{tpu_custom_call.1} parent=51 // pred_fallthru
          _
      $region52: #{tpu_custom_call.1} parent=5 // pred_fallthru
        _
    $region6: #{tpu_custom_call.1} parent=1 // loop_footer
      %s21 = sadd.s32 1, %s17
    $region7: #{tpu_custom_call.1} parent=1 // loop_footer_branch
      %16 = sbr.rel target = $region3
    $region8: #{tpu_custom_call.1} parent=1 // loop_exit
      _
    %335 = vsyncpa [#allocation3], 1
    %s336 = scalar_lea.sflag [#allocation3], 1
    %337 = vsyncpa %s336, 1
    %338 = vsyncpa [#allocation6], 1
    %339 = vsyncpa [#allocation4], 1
    %s340 = scalar_lea.sflag [#allocation4], 1
    %341 = vsyncpa %s340, 1

</llo_original>
